<compile_context>
chip_gen: v7x
topology: tpu7x:2x2x1
jax: 0.10.0
libtpu: 0.0.40
codegen_flags: <defaults>
</compile_context>

<pallas_src>
import jax
import jax.numpy as jnp
from jax.experimental import pallas as pl
from jax.experimental.pallas import tpu as pltpu


def _rev_coupling_kernel(x0_ref, patches_ref, w_ref, b_ref, o_ref):
    """One batch element per grid step.

    x0_ref      : (1, C,   H*W)   residual stream (NCHW flattened)
    patches_ref : (1, 9*C, H*W)   im2col patches of padded x1
    w_ref       : (C, 9*C)        conv weight, (Cout, tap*Cin)
    b_ref       : (C, 1)          conv bias
    o_ref       : (1, C, H*W)     y0 = x0 + conv(x1) + bias
    """
    # Single fused MXU call: (C, 9C) x (9C, H*W) -> (C, H*W), lane axis = H*W.
    conv = jnp.dot(w_ref[...], patches_ref[0],
                   preferred_element_type=jnp.float32)
    # Fold residual + bias into one VPU pass; lane-dense (H*W multiple of 128)
    # unmasked stores.
    o_ref[0] = (x0_ref[0].astype(jnp.float32) + conv
                + b_ref[...].astype(jnp.float32)).astype(o_ref.dtype)


def reversible_wrapper_forward(x0_nchw, x1_nchw, weight_hwio, bias):
    """y0 = x0 + Conv2d(x1) with 3x3 kernel, padding=1 (revlib additive coupling).

    x0_nchw, x1_nchw : (B, C, H, W) float32
    weight_hwio      : (3, 3, C, C) float32  (kh, kw, Cin, Cout)
    bias             : (C,) float32
    returns          : (B, C, H, W) float32
    """
    B, C, H, W = x0_nchw.shape
    HW = H * W
    K = 9 * C

    # --- layout plumbing (XLA glue, not the hot path) -----------------------
    # Zero-pad spatially for the 3x3 / padding=1 conv, then build im2col
    # patches: patches[b, tap*C + ci, h*W + w] = x1p[b, ci, h+ky, w+kx].
    x1p = jnp.pad(x1_nchw, ((0, 0), (0, 0), (1, 1), (1, 1)))       # (B,C,H+2,W+2)
    taps = [x1p[:, :, ky:ky + H, kx:kx + W]                        # 9 x (B,C,H,W)
            for ky in range(3) for kx in range(3)]
    patches = jnp.concatenate(taps, axis=1).reshape(B, K, HW)      # (B,9C,HW)

    # Weight as (Cout, tap*Cin) so conv = w2 @ patches.
    w2 = jnp.transpose(weight_hwio, (3, 0, 1, 2)).reshape(C, K)    # (C, 9C)
    b2 = bias.reshape(C, 1)                                        # (C, 1)

    x0_flat = x0_nchw.reshape(B, C, HW)                            # free reshape

    out_flat = pl.pallas_call(
        _rev_coupling_kernel,
        out_shape=jax.ShapeDtypeStruct((B, C, HW), x0_nchw.dtype),
        grid_spec=pltpu.PrefetchScalarGridSpec(
            num_scalar_prefetch=0,
            grid=(B,),
            in_specs=[
                pl.BlockSpec((1, C, HW), lambda b: (b, 0, 0)),
                pl.BlockSpec((1, K, HW), lambda b: (b, 0, 0)),
                pl.BlockSpec((C, K), lambda b: (0, 0)),
                pl.BlockSpec((C, 1), lambda b: (0, 0)),
            ],
            out_specs=pl.BlockSpec((1, C, HW), lambda b: (b, 0, 0)),
        ),
        compiler_params=pltpu.CompilerParams(
            dimension_semantics=("parallel",)),
    )(x0_flat, patches, w2, b2)

    # Output is already NCHW (flattened spatially) -> free reshape.
    return out_flat.reshape(B, C, H, W)


def _reference_forward(x0_nchw, x1_nchw, weight_hwio, bias):
    """Pure-JAX reference: x0 + conv2d(x1, padding=SAME)."""
    x1 = jnp.transpose(x1_nchw, (0, 2, 3, 1))
    conv = jax.lax.conv_general_dilated(
        x1, weight_hwio, window_strides=(1, 1), padding="SAME",
        dimension_numbers=("NHWC", "HWIO", "NHWC"))
    conv = conv + bias.reshape(1, 1, 1, -1)
    y0_nhwc = jnp.transpose(x0_nchw, (0, 2, 3, 1)) + conv
    return jnp.transpose(y0_nhwc, (0, 3, 1, 2))


if __name__ == "__main__":
    B, C, H, W = 2, 4, 16, 16

    key = jax.random.PRNGKey(0)
    k0, k1, kw, kb = jax.random.split(key, 4)

    x0 = jax.random.normal(k0, (B, C, H, W), dtype=jnp.float32)
    x1 = jax.random.normal(k1, (B, C, H, W), dtype=jnp.float32)

    # Deterministic Conv2d(C, C, 3, padding=1) params (PyTorch-style uniform init).
    fan_in = C * 3 * 3
    bound = 1.0 / (fan_in ** 0.5)
    weight_hwio = jax.random.uniform(kw, (3, 3, C, C), jnp.float32,
                                     minval=-bound, maxval=bound)
    bias = jax.random.uniform(kb, (C,), jnp.float32, minval=-bound, maxval=bound)

    out = reversible_wrapper_forward(x0, x1, weight_hwio, bias)
    out = jax.block_until_ready(out)

    ref = _reference_forward(x0, x1, weight_hwio, bias)
    assert out.shape == (B, C, H, W)
    assert jnp.allclose(out, ref, atol=1e-4, rtol=1e-4)

    print("KERNEL_OK")
</pallas_src>

<mosaic_0001>
module attributes {stable_mosaic.version = 11 : i64} {
  func.func @_rev_coupling_kernel(%arg0: i32, %arg1: memref<1x4x256xf32, #tpu.memory_space<vmem>>, %arg2: memref<1x36x256xf32, #tpu.memory_space<vmem>>, %arg3: memref<4x36xf32, #tpu.memory_space<vmem>>, %arg4: memref<4x1xf32, #tpu.memory_space<vmem>>, %arg5: memref<1x4x256xf32, #tpu.memory_space<vmem>>) attributes {dimension_semantics = [#tpu.dimension_semantics<parallel>], iteration_bounds = array<i64: 2>, scalar_prefetch = 0 : i64, scratch_operands = 0 : i64, tpu.core_type = #tpu.core_type<tc>, window_params = [{transform_indices = @transform_0, window_bounds = array<i64: 1, 4, 256>}, {transform_indices = @transform_1, window_bounds = array<i64: 1, 36, 256>}, {pipeline_mode = #tpu.pipeline_mode<synchronous>, transform_indices = @transform_2, window_bounds = array<i64: 4, 36>}, {pipeline_mode = #tpu.pipeline_mode<synchronous>, transform_indices = @transform_3, window_bounds = array<i64: 4, 1>}, {transform_indices = @transform_4, window_bounds = array<i64: 1, 4, 256>}]} {
    %c0 = arith.constant 0 : index
    %c0_0 = arith.constant 0 : index
    %0 = vector.load %arg3[%c0, %c0_0] : memref<4x36xf32, #tpu.memory_space<vmem>>, vector<4x36xf32>
    %c0_1 = arith.constant 0 : index
    %c0_2 = arith.constant 0 : index
    %c0_3 = arith.constant 0 : index
    %1 = vector.load %arg2[%c0_1, %c0_2, %c0_3] : memref<1x36x256xf32, #tpu.memory_space<vmem>>, vector<1x36x256xf32>
    %2 = vector.shape_cast %1 : vector<1x36x256xf32> to vector<36x256xf32>
    %cst = arith.constant dense<0.000000e+00> : vector<4x256xf32>
    %3 = tpu.matmul %0, %2, %cst {dimension_numbers = #tpu.dot_dimension_numbers<[1], [0], [0], [1], [0, 0, 1, 1], [], []>} : vector<4x36xf32>, vector<36x256xf32>, vector<4x256xf32> -> vector<4x256xf32>
    %c0_4 = arith.constant 0 : index
    %c0_5 = arith.constant 0 : index
    %c0_6 = arith.constant 0 : index
    %4 = vector.load %arg1[%c0_4, %c0_5, %c0_6] : memref<1x4x256xf32, #tpu.memory_space<vmem>>, vector<1x4x256xf32>
    %5 = vector.shape_cast %4 : vector<1x4x256xf32> to vector<4x256xf32>
    %6 = arith.addf %5, %3 : vector<4x256xf32>
    %c0_7 = arith.constant 0 : index
    %c0_8 = arith.constant 0 : index
    %7 = vector.load %arg4[%c0_7, %c0_8] : memref<4x1xf32, #tpu.memory_space<vmem>>, vector<4x1xf32>
    %8 = vector.broadcast %7 : vector<4x1xf32> to vector<4x256xf32>
    %9 = arith.addf %6, %8 : vector<4x256xf32>
    %c0_9 = arith.constant 0 : index
    %c0_10 = arith.constant 0 : index
    %c0_11 = arith.constant 0 : index
    %10 = vector.load %arg5[%c0_9, %c0_10, %c0_11] : memref<1x4x256xf32, #tpu.memory_space<vmem>>, vector<1x4x256xf32>
    %11 = vector.shape_cast %10 : vector<1x4x256xf32> to vector<4x256xf32>
    %12 = vector.shape_cast %9 : vector<4x256xf32> to vector<1x4x256xf32>
    tpu.vector_store %arg5[%c0_9, %c0_10, %c0_11], %12 {strides = array<i32>} : memref<1x4x256xf32, #tpu.memory_space<vmem>>, vector<1x4x256xf32>,
    return
  }
  func.func @transform_0(%arg0: i32) -> (i32, i32, i32) {
    %c0_i32 = arith.constant 0 : i32
    %c0_i32_0 = arith.constant 0 : i32
    %c0_i32_1 = arith.constant 0 : i32
    return %arg0, %c0_i32, %c0_i32_0 : i32, i32, i32
  }
  func.func @transform_1(%arg0: i32) -> (i32, i32, i32) {
    %c0_i32 = arith.constant 0 : i32
    %c0_i32_0 = arith.constant 0 : i32
    %c0_i32_1 = arith.constant 0 : i32
    return %arg0, %c0_i32, %c0_i32_0 : i32, i32, i32
  }
  func.func @transform_2(%arg0: i32) -> (i32, i32) {
    %c0_i32 = arith.constant 0 : i32
    %c0_i32_0 = arith.constant 0 : i32
    %c0_i32_1 = arith.constant 0 : i32
    return %c0_i32, %c0_i32_0 : i32, i32
  }
  func.func @transform_3(%arg0: i32) -> (i32, i32) {
    %c0_i32 = arith.constant 0 : i32
    %c0_i32_0 = arith.constant 0 : i32
    %c0_i32_1 = arith.constant 0 : i32
    return %c0_i32, %c0_i32_0 : i32, i32
  }
  func.func @transform_4(%arg0: i32) -> (i32, i32, i32) {
    %c0_i32 = arith.constant 0 : i32
    %c0_i32_0 = arith.constant 0 : i32
    %c0_i32_1 = arith.constant 0 : i32
    return %arg0, %c0_i32, %c0_i32_0 : i32, i32, i32
  }
}

</mosaic_0001>

<llo_original>
// kernel: tpu_custom_call.1
$region0: #{tpu_custom_call.1}
  #allocation0 [shape = 'u32[]', space=smem, size = 0x4, offset = 0x4, fixed_abs, tag = 'smem constant byte address 0x4 - core index']
  #allocation1 [shape = 'u32[144,128]{1,0:T(1,128)}', space=vmem, size = 0x12000, scoped, tag = 'internal scratch']
  %s0 = inlined_call_operand.vmem [shape: f32[2,4,256], index: 0, kind: input, shape index: {}]
  %s1 = inlined_call_operand.vmem [shape: f32[2,36,256], index: 1, kind: input, shape index: {}]
  %s2 = inlined_call_operand.vmem [shape: f32[4,36], index: 2, kind: input, shape index: {}]
  %s3 = inlined_call_operand.vmem [shape: f32[4,1], index: 3, kind: input, shape index: {}]
  %s4 = inlined_call_operand.hbm [shape: f32[2,4,256], index: 4, kind: output, shape index: {}]
  %s5 = sld [smem:[#allocation0]]
  $region49: #{tpu_custom_call.1} parent=0
    _
  %s7 = ssub.s32 1, %s5
  %s8 = scalar_select 0, %s7, %s5
  $region1: #{tpu_custom_call.1} parent=0
    #allocation2 [shape = 'u8[8192]{0}', space=vmem, size = 0x2000, scoped, tag = 'output window, operand 0']
    #allocation3 [shape = 's32[2]{0}', space=sflag, size = 0x8, scoped, tag = 'scoped memory for tpu_custom_call.1']
    %9 = vsyncpa [#allocation3], 0
    %s10 = scalar_lea.sflag [#allocation3], 1
    %11 = vsyncpa %s10, 0
    loop: start=0, step=1, limit=4
    $region2: #{tpu_custom_call.1} parent=1 // loop_pre_header
      _
    $region3: #{tpu_custom_call.1} parent=1 // loop_header
      %s13 = sphi 0, %s17
      %p14 = scmp.ge.s32.totalorder %s13, 4
      %s23 = sphi 0, %s25
      %s26 = sphi 0, %s23
      %s27 = sphi 0, %s26
      %s43 = sphi 0, %s27
      %s49 = sphi 0, %s51
      %s52 = sphi 0, %s49
      %s53 = sphi 0, %s52
      %s69 = sphi 0, %s53
      %s73 = sphi 0, %s73
      %s75 = sphi 0, %s73
      %s76 = sphi 0, %s75
      %s90 = sphi 0, %s76
      %s94 = sphi 0, %s94
      %s96 = sphi 0, %s94
      %s97 = sphi 0, %s96
      %s111 = sphi 0, %s97
      %s117 = sphi 0, %s119
      %s120 = sphi 0, %s117
      %s121 = sphi 0, %s120
      %s137 = sphi 0, %s121
    $region4: #{tpu_custom_call.1} parent=1 // loop_header_branch
      %16 = sbr.rel (%p14) target = $region8
    $region5: #{tpu_custom_call.1} parent=1 // loop_body
      %s18 = ssub.s32 %s13, 1
      %s19 = ssub.s32 %s13, 2
      %s20 = sadd.s32 %s13, 1
      %s21 = ssub.s32 %s13, %s20
      %p22 = scmp.eq.s32.totalorder %s21, 0
      %s24 = sadd.s32 %s23, 1
      %s25 = scalar_select %p22, %s23, %s24
      %p28 = pneg %p22
      %p29 = scmp.eq.s32.totalorder %s13, 1
      %p30 = por %p28, %p29
      %p31 = scmp.ne.s32.totalorder %s23, %s26
      %p32 = scmp.eq.s32.totalorder %s13, 0
      %p33 = por %p31, %p32
      %p34 = scmp.ne.s32.totalorder %s23, %s26
      %p35 = scmp.eq.s32.totalorder %s18, 1
      %p36 = por %p34, %p35
      %p37 = scmp.ne.s32.totalorder %s26, %s27
      %p38 = scmp.eq.s32.totalorder %s18, 0
      %p39 = por %p37, %p38
      %p40 = scmp.ne.s32.totalorder %s26, %s27
      %p41 = scmp.eq.s32.totalorder %s19, 1
      %p42 = por %p40, %p41
      %p44 = scmp.ne.s32.totalorder %s27, %s43
      %p45 = scmp.eq.s32.totalorder %s19, 0
      %p46 = por %p44, %p45
      %s47 = ssub.s32 %s13, %s20
      %p48 = scmp.eq.s32.totalorder %s47, 0
      %s50 = sadd.s32 %s49, 1
      %s51 = scalar_select %p48, %s49, %s50
      %p54 = pneg %p48
      %p55 = scmp.eq.s32.totalorder %s13, 1
      %p56 = por %p54, %p55
      %p57 = scmp.ne.s32.totalorder %s49, %s52
      %p58 = scmp.eq.s32.totalorder %s13, 0
      %p59 = por %p57, %p58
      %p60 = scmp.ne.s32.totalorder %s49, %s52
      %p61 = scmp.eq.s32.totalorder %s18, 1
      %p62 = por %p60, %p61
      %p63 = scmp.ne.s32.totalorder %s52, %s53
      %p64 = scmp.eq.s32.totalorder %s18, 0
      %p65 = por %p63, %p64
      %p66 = scmp.ne.s32.totalorder %s52, %s53
      %p67 = scmp.eq.s32.totalorder %s19, 1
      %p68 = por %p66, %p67
      %p70 = scmp.ne.s32.totalorder %s53, %s69
      %p71 = scmp.eq.s32.totalorder %s19, 0
      %p72 = por %p70, %p71
      %s74 = sadd.s32 %s73, 1
      %p77 = scmp.eq.s32.totalorder %s13, 1
      %p78 = scmp.ne.s32.totalorder %s73, %s75
      %p79 = scmp.eq.s32.totalorder %s13, 0
      %p80 = por %p78, %p79
      %p81 = scmp.ne.s32.totalorder %s73, %s75
      %p82 = scmp.eq.s32.totalorder %s18, 1
      %p83 = por %p81, %p82
      %p84 = scmp.ne.s32.totalorder %s75, %s76
      %p85 = scmp.eq.s32.totalorder %s18, 0
      %p86 = por %p84, %p85
      %p87 = scmp.ne.s32.totalorder %s75, %s76
      %p88 = scmp.eq.s32.totalorder %s19, 1
      %p89 = por %p87, %p88
      %p91 = scmp.ne.s32.totalorder %s76, %s90
      %p92 = scmp.eq.s32.totalorder %s19, 0
      %p93 = por %p91, %p92
      %s95 = sadd.s32 %s94, 1
      %p98 = scmp.eq.s32.totalorder %s13, 1
      %p99 = scmp.ne.s32.totalorder %s94, %s96
      %p100 = scmp.eq.s32.totalorder %s13, 0
      %p101 = por %p99, %p100
      %p102 = scmp.ne.s32.totalorder %s94, %s96
      %p103 = scmp.eq.s32.totalorder %s18, 1
      %p104 = por %p102, %p103
      %p105 = scmp.ne.s32.totalorder %s96, %s97
      %p106 = scmp.eq.s32.totalorder %s18, 0
      %p107 = por %p105, %p106
      %p108 = scmp.ne.s32.totalorder %s96, %s97
      %p109 = scmp.eq.s32.totalorder %s19, 1
      %p110 = por %p108, %p109
      %p112 = scmp.ne.s32.totalorder %s97, %s111
      %p113 = scmp.eq.s32.totalorder %s19, 0
      %p114 = por %p112, %p113
      %s115 = ssub.s32 %s13, %s20
      %p116 = scmp.eq.s32.totalorder %s115, 0
      %s118 = sadd.s32 %s117, 1
      %s119 = scalar_select %p116, %s117, %s118
      %p122 = pneg %p116
      %p123 = scmp.eq.s32.totalorder %s13, 1
      %p124 = por %p122, %p123
      %p125 = scmp.ne.s32.totalorder %s117, %s120
      %p126 = scmp.eq.s32.totalorder %s13, 0
      %p127 = por %p125, %p126
      %p128 = scmp.ne.s32.totalorder %s117, %s120
      %p129 = scmp.eq.s32.totalorder %s18, 1
      %p130 = por %p128, %p129
      %p131 = scmp.ne.s32.totalorder %s120, %s121
      %p132 = scmp.eq.s32.totalorder %s18, 0
      %p133 = por %p131, %p132
      %p134 = scmp.ne.s32.totalorder %s120, %s121
      %p135 = scmp.eq.s32.totalorder %s19, 1
      %p136 = por %p134, %p135
      %p138 = scmp.ne.s32.totalorder %s121, %s137
      %p139 = scmp.eq.s32.totalorder %s19, 0
      %p140 = por %p138, %p139
      %p141 = scmp.le.s32.totalorder 1, %s13
      %p142 = scmp.lt.s32.totalorder %s13, 3
      %p143 = pnand %p141, %p142
      %p144 = pneg %p143
      // Predicated region
      $region9: #{tpu_custom_call.1} parent=5 // pred_check
        _
      $region10: #{tpu_custom_call.1} parent=5 // pred_check_branch
        %146 = sbr.rel (%p143) target = $region12
      $region11: #{tpu_custom_call.1} parent=5 // pred_region
        %s147 = ssub.s32 %s13, 1
        // Predicated region
        $region13: #{tpu_custom_call.1} parent=11 // pred_check
          %p148 = pneg %p86
        $region14: #{tpu_custom_call.1} parent=11 // pred_check_branch
          %150 = sbr.rel (%p148) target = $region16
        $region15: #{tpu_custom_call.1} parent=11 // pred_region
          _
        $region16: #{tpu_custom_call.1} parent=11 // pred_fallthru
          _
        // Predicated region
        $region17: #{tpu_custom_call.1} parent=11 // pred_check
          %p151 = pneg %p107
        $region18: #{tpu_custom_call.1} parent=11 // pred_check_branch
          %153 = sbr.rel (%p151) target = $region20
        $region19: #{tpu_custom_call.1} parent=11 // pred_region
          _
        $region20: #{tpu_custom_call.1} parent=11 // pred_fallthru
          _
      $region12: #{tpu_custom_call.1} parent=5 // pred_fallthru
        _
      %p154 = scmp.lt.s32.totalorder %s13, 2
      // Predicated region
      $region21: #{tpu_custom_call.1} parent=5 // pred_check
        %p155 = pneg %p154
      $region22: #{tpu_custom_call.1} parent=5 // pred_check_branch
        %157 = sbr.rel (%p155) target = $region24
      $region23: #{tpu_custom_call.1} parent=5 // pred_region
        // Predicated region
        $region25: #{tpu_custom_call.1} parent=23 // pred_check
          %p158 = pneg %p33
        $region26: #{tpu_custom_call.1} parent=23 // pred_check_branch
          %160 = sbr.rel (%p158) target = $region28
        $region27: #{tpu_custom_call.1} parent=23 // pred_region
          %p161 = scmp.lt.s32.totalorder %s13, 1
          %s162 = scalar_select %p161, %s13, 1
          %s163 = smul.addr %s162, 2
          %s164 = smul.addr %s163, 4
          %s165 = scalar_lea.vmem %s0, %s164
        $region28: #{tpu_custom_call.1} parent=23 // pred_fallthru
          _
        // Predicated region
        $region29: #{tpu_custom_call.1} parent=23 // pred_check
          %p166 = pneg %p59
        $region30: #{tpu_custom_call.1} parent=23 // pred_check_branch
          %168 = sbr.rel (%p166) target = $region32
        $region31: #{tpu_custom_call.1} parent=23 // pred_region
          %p169 = scmp.lt.s32.totalorder %s13, 1
          %s170 = scalar_select %p169, %s13, 1
          %s171 = smul.addr %s170, 10
          %s172 = smul.addr %s171, 8
          %s173 = scalar_lea.vmem %s1, %s172
        $region32: #{tpu_custom_call.1} parent=23 // pred_fallthru
          _
      $region24: #{tpu_custom_call.1} parent=5 // pred_fallthru
        _
      %p174 = scmp.le.s32.totalorder 1, %s13
      %p175 = scmp.lt.s32.totalorder %s13, 3
      %p176 = pnand %p174, %p175
      %p177 = pneg %p176
      // Predicated region
      $region33: #{tpu_custom_call.1} parent=5 // pred_check
        _
      $region34: #{tpu_custom_call.1} parent=5 // pred_check_branch
        %179 = sbr.rel (%p176) target = $region36
      $region35: #{tpu_custom_call.1} parent=5 // pred_region
        %s180 = ssub.s32 %s13, 1
        %p181 = scmp.lt.s32.totalorder %s18, 1
        %s182 = scalar_select %p181, %s18, 1
        %s183 = smul.addr %s182, 2
        %s184 = smul.addr %s183, 4
        %s185 = scalar_lea.vmem %s0, %s184
        %p186 = pneg %p39
        %p187 = pneg %p36
        %p188 = scmp.lt.s32.totalorder %s18, 1
        %s189 = scalar_select %p188, %s18, 1
        %s190 = smul.addr %s189, 10
        %s191 = smul.addr %s190, 8
        %s192 = scalar_lea.vmem %s1, %s191
        %p193 = pneg %p65
        %p194 = pneg %p62
        %p195 = pneg %p86
        %p196 = pneg %p83
        %p197 = pneg %p107
        %p198 = pneg %p104
        %p199 = pneg %p133
        %p200 = pneg %p130
        %s201 = sand.u32 %s120, 1
        %s202 = scalar_lea.sflag [#allocation3], %s201
        %s203 = sand.u32 %s120, 1
        %s204 = smul.addr %s203, 8
        %s205 = scalar_lea.vmem [#allocation2], %s204
        %p206 = scmp.lt.s32.totalorder %s18, 1
        %s207 = scalar_select %p206, %s18, 1
        %s208 = smul.addr %s207, 2
        %s209 = smul.addr %s208, 4
        %s210 = scalar_lea.vmem %s0, %s209
        %p211 = scmp.lt.s32.totalorder %s18, 1
        %s212 = scalar_select %p211, %s18, 1
        %s213 = smul.addr %s212, 10
        %s214 = smul.addr %s213, 8
        %s215 = scalar_lea.vmem %s1, %s214
        %v216 = vld [vmem:[%s2] sm:$0xf]
        %v217 = vld [vmem:[%s215] sm:$0xff]
        %v218 = vld [vmem:[%s215 + $0x8] sm:$0xff]
        %v219 = vld [vmem:[%s215 + $0x10] sm:$0xff]
        %v220 = vld [vmem:[%s215 + $0x18] sm:$0xff]
        %v221 = vld [vmem:[%s215 + $0x20] sm:$0xff]
        %v222 = vld [vmem:[%s215 + $0x28] sm:$0xff]
        %v223 = vld [vmem:[%s215 + $0x30] sm:$0xff]
        %v224 = vld [vmem:[%s215 + $0x38] sm:$0xff]
        %v225 = vld [vmem:[%s215 + $0x40] sm:$0xf]
        %v226 = vld [vmem:[%s215 + $0x48] sm:$0xf]
        %vm227 = vcmask 293888
        %v229 = vsel %vm227, %v216, 0
        %vm231 = vcmask 1043456
        %v233 = vsel %vm231, %v225, 0
        %v236 = vsel %vm231, %v226, 0
        %238 = vmatprep.subr.mxu0 %v218
        %239 = vmatpush1.msra.mxu0 %v217
        %240 = vmatprep.subr.mxu0 %v220
        %241 = vmatpush1.msra.mxu0 %v219
        %242 = vmatprep.subr.mxu0 %v222
        %243 = vmatpush1.msra.mxu0 %v221
        %244 = vmatprep.subr.mxu0 %v224
        %245 = vmatpush1.msra.mxu0 %v223
        %246 = vmatprep.subr.mxu0 %v236
        %247 = vmatpush1.msra.mxu0 %v233
        %248 = vmatprep.subr.mxu0 0.0
        %249 = vmatpush1.msra.mxu0 0.0
        %250 = vmatprep.subr.mxu0 0.0
        %251 = vmatpush1.msra.mxu0 0.0
        %252 = vmatprep.subr.mxu0 0.0
        %253 = vmatpush1.msra.mxu0 0.0
        %254 = vmatprep.subr.mxu0 0.0
        %255 = vmatpush1.msra.mxu0 0.0
        %256 = vmatprep.subr.mxu0 0.0
        %257 = vmatpush1.msra.mxu0 0.0
        %258 = vmatprep.subr.mxu0 0.0
        %259 = vmatpush1.msra.mxu0 0.0
        %260 = vmatprep.subr.mxu0 0.0
        %261 = vmatpush1.msra.mxu0 0.0
        %262 = vmatprep.subr.mxu0 0.0
        %263 = vmatpush1.msra.mxu0 0.0
        %264 = vmatprep.subr.mxu0 0.0
        %265 = vmatpush1.msra.mxu0 0.0
        %266 = vmatprep.subr.mxu0 0.0
        %267 = vmatpush1.msra.mxu0 0.0
        %268 = vmatprep.subr.mxu0 0.0
        %269 = vmatpush1.msra.mxu0 0.0
        %270 = vmatprep.subr.mxu0 0.0
        %271 = vmatpush1.msra.mxu0 0.0
        %272 = vmatprep.subr.mxu0 0.0
        %273 = vmatpush1.msra.mxu0 0.0
        %274 = vmatprep.subr.mxu0 0.0
        %275 = vmatpush1.msra.mxu0 0.0
        %276 = vmatprep.subr.mxu0 0.0
        %277 = vmatpush1.msra.mxu0 0.0
        %278 = vmatprep.subr.mxu0 0.0
        %279 = vmatpush1.msra.mxu0 0.0
        %280 = vmatprep.subr.mxu0 0.0
        %281 = vmatpush1.msra.mxu0 0.0
        %282 = vmatprep.subr.mxu0 0.0
        %283 = vmatpush1.msra.mxu0 0.0
        %284 = vmatprep.subr.mxu0 0.0
        %285 = vmatpush1.msra.mxu0 0.0
        %286 = vmatprep.subr.mxu0 0.0
        %287 = vmatpush1.msra.mxu0 0.0
        %288 = vmatprep.subr.mxu0 0.0
        %289 = vmatpush1.msra.mxu0 0.0
        %290 = vmatprep.subr.mxu0 0.0
        %291 = vmatpush1.msra.mxu0 0.0
        %292 = vmatprep.subr.mxu0 0.0
        %293 = vmatpush1.msra.mxu0 0.0
        %294 = vmatprep.subr.mxu0 0.0
        %295 = vmatpush1.msra.mxu0 0.0
        %296 = vmatprep.subr.mxu0 0.0
        %297 = vmatpush1.msra.mxu0 0.0
        %298 = vmatprep.subr.mxu0 0.0
        %299 = vmatpush1.msra.mxu0 0.0
        %300 = vmatprep.subr.mxu0 0.0
        %301 = vmatpush1.msra.mxu0 0.0
        %302 = vmatprep.mubr.f32.mxu0 0.0
        %303 = vmatmul.mubr.f32.gmra.mrb[0].mxu0 %v229
        %v304 = vpop.f32.mrb[0].mxu0
        %v305 = vadd.f32 0.0, %v304
        %v306 = vpop.f32.mrb[0].mxu0
        %v307 = vadd.f32 0.0, %v306
        %308 = vdwg.mxu0
        %v309 = vld [vmem:[%s210] sm:$0xff]
        %v312 = vcombine.low %v305, %v307
        %v314 = vadd.f32 %v309, %v312
        %v315 = vld [vmem:[%s3] sm:$0xf]
        %317 = vset.pattern.permute.xlu0 0
        %318 = vperm.xlu0 %317, %v315
        %v319 = vpop.permute.xlu0 %318
        %v321 = vunpack.c.l.s4 839922192
        %v322 = vunpack.c.0.s8 %v321
        %v323 = vlaneseq
        %v324 = vshrl.u32 %v323, 7
        %v325 = vsub.s32 %v322, %v324
        %v326 = vrot.slane %v319, %v325
        %v328 = vadd.f32 %v314, %v326
        %329 = vst [vmem:[%s205] sm:$0xff] %v328
        %s330 = sand.u32 %s120, 1
        %s331 = scalar_lea.sflag [#allocation3], %s330
        %s332 = sand.u32 %s120, 1
        %s333 = smul.addr %s332, 8
        %s334 = scalar_lea.vmem [#allocation2], %s333
        // Predicated region
        $region37: #{tpu_custom_call.1} parent=35 // pred_check
          %p335 = pneg %p130
        $region38: #{tpu_custom_call.1} parent=35 // pred_check_branch
          %337 = sbr.rel (%p335) target = $region40
        $region39: #{tpu_custom_call.1} parent=35 // pred_region
          %s339 = ssub.s32 128, 128
          %340 = vsyncadd %s331, %s339
          %s341 = smul.addr %s18, 2
          %s342 = smul.addr %s341, 64
          %s343 = scalar_lea.hbm %s4, %s342
          %s345 = sshll.u32 %s334, 4
          %s346 = int_to_ptr.vmem [resolvable:$true] %s345
          %348 = dma.vmem_to_hbm [thread:$0]  %s346, 128, %s343, %s331
        $region40: #{tpu_custom_call.1} parent=35 // pred_fallthru
          _
      $region36: #{tpu_custom_call.1} parent=5 // pred_fallthru
        _
      %p349 = scmp.le.s32.totalorder 2, %s13
      // Predicated region
      $region41: #{tpu_custom_call.1} parent=5 // pred_check
        %p350 = pneg %p349
      $region42: #{tpu_custom_call.1} parent=5 // pred_check_branch
        %352 = sbr.rel (%p350) target = $region44
      $region43: #{tpu_custom_call.1} parent=5 // pred_region
        %s353 = ssub.s32 %s13, 2
        // Predicated region
        $region45: #{tpu_custom_call.1} parent=43 // pred_check
          %p354 = pneg %p136
        $region46: #{tpu_custom_call.1} parent=43 // pred_check_branch
          %356 = sbr.rel (%p354) target = $region48
        $region47: #{tpu_custom_call.1} parent=43 // pred_region
          %s357 = sand.u32 %s121, 1
          %s358 = scalar_lea.sflag [#allocation3], %s357
          %s359 = sand.u32 %s121, 1
          %s360 = smul.addr %s359, 8
          %s361 = scalar_lea.vmem [#allocation2], %s360
          %362 = dma.done %s358, 128
        $region48: #{tpu_custom_call.1} parent=43 // pred_fallthru
          _
      $region44: #{tpu_custom_call.1} parent=5 // pred_fallthru
        _
    $region6: #{tpu_custom_call.1} parent=1 // loop_footer
      %s17 = sadd.s32 1, %s13
    $region7: #{tpu_custom_call.1} parent=1 // loop_footer_branch
      %12 = sbr.rel target = $region3
    $region8: #{tpu_custom_call.1} parent=1 // loop_exit
      _
    %363 = vsyncpa [#allocation3], 1
    %s364 = scalar_lea.sflag [#allocation3], 1
    %365 = vsyncpa %s364, 1

</llo_original>
